<compile_context>
chip_gen: v6e
topology: v6e:2x2x1
jax: 0.10.0
libtpu: 0.0.40
codegen_flags: <defaults>
</compile_context>

<pallas_src>
import functools

import jax
import jax.numpy as jnp
from jax import lax
from jax.experimental import pallas as pl
from jax.experimental.pallas import tpu as pltpu

_LANE = 128
_MIB = 1024 * 1024


# ----------------------------------------------------------------------------
# Small helpers
# ----------------------------------------------------------------------------
def _round_up(x, m):
    return ((x + m - 1) // m) * m


def _divisors(n):
    out = set()
    d = 1
    while d * d <= n:
        if n % d == 0:
            out.add(d)
            out.add(n // d)
        d += 1
    return sorted(out)


def _pick_tile(n, cap, legal):
    """Largest divisor of n that is legal and <= cap; else the smallest legal one."""
    cands = [d for d in _divisors(n) if legal(d)]
    fits = [d for d in cands if d <= cap]
    return max(fits) if fits else min(cands)


def _vmem_capacity_bytes():
    try:
        info = pltpu.get_tpu_info()
        cap = int(getattr(info, "vmem_capacity_bytes", 0) or 0)
        if cap > 0:
            return cap
    except Exception:
        pass
    return 64 * _MIB  # conservative default (v7x per-TensorCore VMEM)


def _num_tensorcores():
    try:
        info = pltpu.get_tpu_info()
        for name in ("num_tensorcores", "tensorcores_per_chip", "num_cores",
                     "core_count"):
            v = getattr(info, name, None)
            if v:
                return int(v)
    except Exception:
        pass
    try:
        if "v7" in jax.devices()[0].device_kind.lower():
            return 2
    except Exception:
        pass
    return 1


def _nonlin(pre, nonlinearity):
    if nonlinearity in ("tanh", "Tanh"):
        return jnp.tanh(pre)
    if nonlinearity in ("relu", "ReLU"):
        return jnp.maximum(pre, 0.0)
    raise ValueError(f"nonlinearity not recognized: {nonlinearity!r}")


# ----------------------------------------------------------------------------
# Kernel 1: fused (x @ W + b) row/column tiled projection (hoisted Xp = x@Win+brec).
# ----------------------------------------------------------------------------
def _matmul_bias_kernel(x_ref, w_ref, b_ref, o_ref):
    acc = jnp.dot(x_ref[...].astype(w_ref.dtype), w_ref[...],
                  preferred_element_type=jnp.float32)
    o_ref[...] = (acc + b_ref[...]).astype(o_ref.dtype)


def _input_projection(x_rows, win_p, brec_p, out_dtype, vmem_limit, cap):
    """x_rows: (M, Nin) time-major rows -> (M, Hp) = x_rows @ Win_p + brec_p."""
    M, Nin = x_rows.shape
    Hp = win_p.shape[-1]
    itm_out = jnp.dtype(out_dtype).itemsize

    tn = _pick_tile(Hp, 512, lambda d: d % _LANE == 0)           # lane-dense N tile
    budget = min(cap // 4, 24 * _MIB)
    budget = max(2 * _MIB, budget - (Nin * tn * itm_out * 2 + tn * 4 * 2))
    per_row = (Nin * x_rows.dtype.itemsize + tn * itm_out) * 2   # double-buffered
    row_cap = max(8, min(2048 if cap > 64 * _MIB else 1024, budget // per_row))
    tm = _pick_tile(M, row_cap, lambda d: d % 8 == 0 or d == M)

    return pl.pallas_call(
        _matmul_bias_kernel,
        out_shape=jax.ShapeDtypeStruct((M, Hp), out_dtype),
        grid_spec=pltpu.PrefetchScalarGridSpec(
            num_scalar_prefetch=0,
            grid=(M // tm, Hp // tn),
            in_specs=[
                pl.BlockSpec((tm, Nin), lambda i, j: (i, 0)),
                pl.BlockSpec((Nin, tn), lambda i, j: (0, j)),
                pl.BlockSpec((1, tn), lambda i, j: (0, j)),
            ],
            out_specs=pl.BlockSpec((tm, tn), lambda i, j: (i, j)),
        ),
        compiler_params=pltpu.CompilerParams(
            dimension_semantics=("parallel", "parallel"),
            vmem_limit_bytes=vmem_limit,
        ),
    )(x_rows, win_p, brec_p)


# ----------------------------------------------------------------------------
# Kernel 2: the sequential recurrence  h <- nl(h @ Wrec + Xp[t]), with the Wout
# projection fused in (per-chunk for emit_all, at the last chunk otherwise).
# grid = (batch_tiles "parallel", time_chunks "arbitrary"); hidden state is
# carried across time chunks in an f32 VMEM scratch.
# ----------------------------------------------------------------------------
def _rnn_recurrence_kernel(xp_ref, wrec_ref, wout_ref, bout_ref, out_ref,
                           hid_ref, *scratch, emit_all, nonlinearity, unroll):
    hchunk_ref = scratch[0] if emit_all else None
    c = pl.program_id(1)

    @pl.when(c == 0)
    def _init():
        hid_ref[...] = jnp.zeros_like(hid_ref)       # hidden_unit_init = zeros

    wrec = wrec_ref[...]
    n_steps, tb = xp_ref.shape[0], xp_ref.shape[1]

    def step(s, h):
        # h is the (tb, Hp) f32 carry; MXU operands in mm_dtype, f32 accumulation.
        pre = jnp.dot(h.astype(wrec.dtype), wrec,
                      preferred_element_type=jnp.float32)
        pre = pre + xp_ref[s].astype(jnp.float32)     # Xp already holds x@Win + brec
        h_new = _nonlin(pre, nonlinearity)
        if emit_all:
            start = s * tb
            if tb % 8 == 0:
                start = pl.multiple_of(start, 8)
            hchunk_ref[pl.ds(start, tb), :] = h_new   # lane-dense f32 chunk slab
        return h_new

    h_final = lax.fori_loop(0, n_steps, step, hid_ref[...], unroll=unroll)
    hid_ref[...] = h_final

    if emit_all:
        # Fused chunk-level output projection: one lane-dense MXU matmul over the
        # chunk's (tc*tb, Hp) hidden slab that is already resident in VMEM.
        proj = jnp.dot(hchunk_ref[...].astype(wout_ref.dtype), wout_ref[...],
                       preferred_element_type=jnp.float32)
        out_ref[...] = (proj + bout_ref[...]).astype(out_ref.dtype)
    else:
        @pl.when(c == pl.num_programs(1) - 1)
        def _finalize():
            proj = jnp.dot(h_final.astype(wout_ref.dtype), wout_ref[...],
                           preferred_element_type=jnp.float32)
            out_ref[...] = (proj + bout_ref[...]).astype(out_ref.dtype)


# ----------------------------------------------------------------------------
# Wrapper
# ----------------------------------------------------------------------------
def rnn_forward(inputs, Win, Wrec, Wout, brec, bout,
                output_over_recurrent_time=False,
                nonlinearity="tanh",
                compute_dtype=jnp.bfloat16):
    """inputs: (B, T, Nin).  Returns (B, Nout) or (B, T, Nout).

    compute_dtype is the MXU-operand dtype (weights / Xp / per-step h cast);
    accumulation, the carried hidden state and the nonlinearity are always f32.
    Use compute_dtype=jnp.float32 to match the PyTorch module bit-for-bit-ish.
    """
    # TODO(synk): non-zero hidden_unit_init tensors and arbitrary Callable
    # nonlinearities are not plumbed through (module defaults: zeros + tanh/relu).
    B, T, Nin = inputs.shape
    H = Wrec.shape[0]
    Nout = Wout.shape[-1]
    out_dtype = inputs.dtype
    mm_dtype = jnp.dtype(compute_dtype)
    f32 = jnp.float32
    emit_all = bool(output_over_recurrent_time)

    # Zero-pad H / Nout to lane multiples (exact: padded hidden cols stay 0
    # through tanh/relu, padded Wout rows/cols are 0 and are sliced off).
    Hp = _round_up(H, _LANE)
    Np = _round_up(Nout, _LANE)
    Win_p = jnp.zeros((Nin, Hp), mm_dtype).at[:, :H].set(Win.astype(mm_dtype))
    Wrec_p = jnp.zeros((Hp, Hp), mm_dtype).at[:H, :H].set(Wrec.astype(mm_dtype))
    Wout_p = jnp.zeros((Hp, Np), mm_dtype).at[:H, :Nout].set(Wout.astype(mm_dtype))
    brec_p = jnp.zeros((1, Hp), f32).at[:, :H].set(brec.reshape(1, H).astype(f32))
    bout_p = jnp.zeros((1, Np), f32).at[:, :Nout].set(bout.reshape(1, Nout).astype(f32))

    # Generation-aware VMEM budgets (64 MiB/TC on v7x, 128 MiB on v5e/v6e).
    cap = _vmem_capacity_bytes()
    vmem_limit = max(16 * _MIB, int(min(cap - 8 * _MIB, cap * 0.85)))

    # 1) Hoisted input projection  Xp[t] = x[:, t] @ Win + brec  as one big
    #    row/column-tiled MXU matmul; Xp stored in mm_dtype (halves HBM stream).
    # TODO(synk): the Nin-wide (B,T,Nin)->(T,B,Nin) transpose could be folded
    # into the projection BlockSpec; it is cheap relative to the Hp-wide Xp slab.
    x_tm = jnp.transpose(inputs, (1, 0, 2)).reshape(T * B, Nin)
    xp = _input_projection(x_tm, Win_p, brec_p, mm_dtype, vmem_limit, cap)
    xp = xp.reshape(T, B, Hp)

    # 2) Sequential recurrence over (batch tiles "parallel", time chunks "arbitrary").
    itm = jnp.dtype(mm_dtype).itemsize
    sublane = {4: 8, 2: 16, 1: 32}.get(itm, 8)
    num_tc = _num_tensorcores()

    # Batch split only on multi-TC parts with MXU-dense halves; emit_all keeps
    # nb == 1 so the fused chunk projection writes one flat (T*B, Np) slab.
    tb, nb = B, 1
    if (not emit_all) and num_tc >= 2 and B % (2 * sublane) == 0 and B // 2 >= 256:
        tb, nb = B // 2, 2

    wrec_bytes = Hp * Hp * itm
    wout_bytes = Hp * Np * itm
    wrec_bufs = 1 if wrec_bytes > 4 * _MIB else 2   # invariant blocks: single-buffer big ones
    wout_bufs = 1 if wout_bytes > 4 * _MIB else 2
    resident = (wrec_bytes * wrec_bufs + wout_bytes * wout_bufs
                + Np * 4 * 2 + tb * Hp * 4)
    budget = max(2 * _MIB, min(cap // 3, vmem_limit - resident - 2 * _MIB))
    per_step = tb * Hp * itm * 2                      # xp stream (double-buffered)
    if emit_all:
        per_step += tb * Np * 4 * 2 + tb * Hp * 4     # out stream + hchunk scratch
    max_steps = max(1, budget // per_step)

    if emit_all:
        tc_legal = lambda d: (d * B) % 8 == 0 or d == T
    else:
        tc_legal = lambda d: True
    tc = _pick_tile(T, max_steps, tc_legal)
    nc = T // tc

    # Cap unroll by live-set size so spills don't steal the single vst slot (v5e).
    if tc <= 8:
        unroll = max(1, tc)
    elif tb * Hp * 4 > 512 * 1024:
        unroll = 4
    else:
        unroll = 8

    def _resident_spec(shape, nbytes):
        if nbytes > 4 * _MIB:
            return pl.BlockSpec(shape, lambda b, c: (0, 0),
                                pipeline_mode=pl.Buffered(1))
        return pl.BlockSpec(shape, lambda b, c: (0, 0))

    xp_spec = pl.BlockSpec((tc, tb, Hp), lambda b, c: (c, b, 0))
    wrec_spec = _resident_spec((Hp, Hp), wrec_bytes)
    wout_spec = _resident_spec((Hp, Np), wout_bytes)
    bout_spec = pl.BlockSpec((1, Np), lambda b, c: (0, 0))

    scratch = [pltpu.VMEM((tb, Hp), jnp.float32)]           # carried hidden state
    if emit_all:
        out_shape = jax.ShapeDtypeStruct((T * B, Np), f32)   # flat lane-dense slab
        out_spec = pl.BlockSpec((tc * B, Np), lambda b, c: (c, 0))
        scratch.append(pltpu.VMEM((tc * tb, Hp), jnp.float32))   # chunk hidden slab
    else:
        out_shape = jax.ShapeDtypeStruct((B, Np), f32)
        out_spec = pl.BlockSpec((tb, Np), lambda b, c: (b, 0))

    kernel = functools.partial(_rnn_recurrence_kernel, emit_all=emit_all,
                               nonlinearity=nonlinearity, unroll=unroll)

    raw = pl.pallas_call(
        kernel,
        out_shape=out_shape,
        grid_spec=pltpu.PrefetchScalarGridSpec(
            num_scalar_prefetch=0,
            grid=(nb, nc),
            in_specs=[xp_spec, wrec_spec, wout_spec, bout_spec],
            out_specs=out_spec,
            scratch_shapes=scratch,
        ),
        compiler_params=pltpu.CompilerParams(
            dimension_semantics=("parallel", "arbitrary"),
            vmem_limit_bytes=vmem_limit,
        ),
    )(xp, Wrec_p, Wout_p, bout_p)

    # 3) Epilogue: layout + un-pad (padded output columns are exactly zero).
    if emit_all:
        out = jnp.transpose(raw.reshape(T, B, Np), (1, 0, 2))[:, :, :Nout]
    else:
        out = raw[:, :Nout]
    return out.astype(out_dtype)


def rnn_reference(inputs, Win, Wrec, Wout, brec, bout,
                  output_over_recurrent_time=False, nonlinearity="tanh"):
    """Plain-JAX reference matching the PyTorch forward exactly."""
    B, T, _ = inputs.shape
    H = Wrec.shape[0]
    nl = jnp.tanh if nonlinearity in ("tanh", "Tanh") else (lambda v: jnp.maximum(v, 0.0))
    hid = jnp.zeros((B, H), dtype=jnp.float32)
    outs = []
    for t in range(T):
        pre = hid @ Wrec + inputs[:, t] @ Win + brec
        hid = nl(pre)
        if output_over_recurrent_time:
            outs.append(hid @ Wout + bout)
    if output_over_recurrent_time:
        return jnp.stack(outs, axis=1)
    return hid @ Wout + bout


if __name__ == "__main__":
    key = jax.random.PRNGKey(0)
    B, T, Nin, H, Nout = 8, 8, 16, 32, 8

    k = jax.random.split(key, 6)
    inputs = jax.random.normal(k[0], (B, T, Nin), dtype=jnp.float32)
    Win = jax.random.normal(k[1], (Nin, H), dtype=jnp.float32) * 0.2
    Wrec = jax.random.normal(k[2], (H, H), dtype=jnp.float32) * (1.0 / H ** 0.5)
    Wout = jax.random.normal(k[3], (H, Nout), dtype=jnp.float32) * 0.2
    brec = jax.random.normal(k[4], (H,), dtype=jnp.float32) * 0.1
    bout = jax.random.normal(k[5], (Nout,), dtype=jnp.float32) * 0.1

    ref = rnn_reference(inputs, Win, Wrec, Wout, brec, bout, False)
    ref_t = rnn_reference(inputs, Win, Wrec, Wout, brec, bout, True)
    ref_r = rnn_reference(inputs, Win, Wrec, Wout, brec, bout, False, "relu")

    # f32 compute path: matches the PyTorch-equivalent reference tightly.
    out = rnn_forward(inputs, Win, Wrec, Wout, brec, bout, False,
                      compute_dtype=jnp.float32)
    jax.block_until_ready(out)
    assert out.shape == (B, Nout)
    assert jnp.allclose(out, ref, atol=1e-4, rtol=1e-4)

    out_t = rnn_forward(inputs, Win, Wrec, Wout, brec, bout, True,
                        compute_dtype=jnp.float32)
    jax.block_until_ready(out_t)
    assert out_t.shape == (B, T, Nout)
    assert jnp.allclose(out_t, ref_t, atol=1e-4, rtol=1e-4)

    out_r = rnn_forward(inputs, Win, Wrec, Wout, brec, bout, False,
                        nonlinearity="relu", compute_dtype=jnp.float32)
    jax.block_until_ready(out_r)
    assert jnp.allclose(out_r, ref_r, atol=1e-4, rtol=1e-4)

    # Default path (bf16 MXU operands, f32 accumulation/state): loose sanity
    # tolerance vs the f32 reference (weights/Xp are quantized to bf16).
    out_bf = rnn_forward(inputs, Win, Wrec, Wout, brec, bout, False)
    jax.block_until_ready(out_bf)
    assert out_bf.shape == (B, Nout)
    assert bool(jnp.isfinite(out_bf).all())
    assert jnp.allclose(out_bf, ref, atol=1e-1, rtol=1e-1)

    out_tbf = rnn_forward(inputs, Win, Wrec, Wout, brec, bout, True)
    jax.block_until_ready(out_tbf)
    assert out_tbf.shape == (B, T, Nout)
    assert bool(jnp.isfinite(out_tbf).all())
    assert jnp.allclose(out_tbf, ref_t, atol=1e-1, rtol=1e-1)

    print("KERNEL_OK")
</pallas_src>

<mosaic_0001>
module attributes {stable_mosaic.version = 11 : i64} {
  func.func @_matmul_bias_kernel(%arg0: i32, %arg1: i32, %arg2: memref<64x16xf32, #tpu.memory_space<vmem>>, %arg3: memref<16x128xf32, #tpu.memory_space<vmem>>, %arg4: memref<1x128xf32, #tpu.memory_space<vmem>>, %arg5: memref<64x128xf32, #tpu.memory_space<vmem>>) attributes {dimension_semantics = [#tpu.dimension_semantics<parallel>, #tpu.dimension_semantics<parallel>], iteration_bounds = array<i64: 1, 1>, scalar_prefetch = 0 : i64, scratch_operands = 0 : i64, tpu.core_type = #tpu.core_type<tc>, window_params = [{transform_indices = @transform_0, window_bounds = array<i64: 64, 16>}, {transform_indices = @transform_1, window_bounds = array<i64: 16, 128>}, {transform_indices = @transform_2, window_bounds = array<i64: 1, 128>}, {transform_indices = @transform_3, window_bounds = array<i64: 64, 128>}]} {
    %c0 = arith.constant 0 : index
    %c0_0 = arith.constant 0 : index
    %0 = vector.load %arg2[%c0, %c0_0] : memref<64x16xf32, #tpu.memory_space<vmem>>, vector<64x16xf32>
    %c0_1 = arith.constant 0 : index
    %c0_2 = arith.constant 0 : index
    %1 = vector.load %arg3[%c0_1, %c0_2] : memref<16x128xf32, #tpu.memory_space<vmem>>, vector<16x128xf32>
    %cst = arith.constant dense<0.000000e+00> : vector<64x128xf32>
    %2 = tpu.matmul %0, %1, %cst {dimension_numbers = #tpu.dot_dimension_numbers<[1], [0], [0], [1], [0, 0, 1, 1], [], []>} : vector<64x16xf32>, vector<16x128xf32>, vector<64x128xf32> -> vector<64x128xf32>
    %c0_3 = arith.constant 0 : index
    %c0_4 = arith.constant 0 : index
    %3 = vector.load %arg4[%c0_3, %c0_4] : memref<1x128xf32, #tpu.memory_space<vmem>>, vector<1x128xf32>
    %4 = vector.broadcast %3 : vector<1x128xf32> to vector<64x128xf32>
    %5 = arith.addf %2, %4 : vector<64x128xf32>
    %c0_5 = arith.constant 0 : index
    %c0_6 = arith.constant 0 : index
    %6 = vector.load %arg5[%c0_5, %c0_6] : memref<64x128xf32, #tpu.memory_space<vmem>>, vector<64x128xf32>
    tpu.vector_store %arg5[%c0_5, %c0_6], %5 {strides = array<i32>} : memref<64x128xf32, #tpu.memory_space<vmem>>, vector<64x128xf32>,
    return
  }
  func.func @transform_0(%arg0: i32, %arg1: i32) -> (i32, i32) {
    %c0_i32 = arith.constant 0 : i32
    %c0_i32_0 = arith.constant 0 : i32
    return %arg0, %c0_i32 : i32, i32
  }
  func.func @transform_1(%arg0: i32, %arg1: i32) -> (i32, i32) {
    %c0_i32 = arith.constant 0 : i32
    %c0_i32_0 = arith.constant 0 : i32
    return %c0_i32, %arg1 : i32, i32
  }
  func.func @transform_2(%arg0: i32, %arg1: i32) -> (i32, i32) {
    %c0_i32 = arith.constant 0 : i32
    %c0_i32_0 = arith.constant 0 : i32
    return %c0_i32, %arg1 : i32, i32
  }
  func.func @transform_3(%arg0: i32, %arg1: i32) -> (i32, i32) {
    %c0_i32 = arith.constant 0 : i32
    return %arg0, %arg1 : i32, i32
  }
}

</mosaic_0001>

<llo_original>
// kernel: tpu_custom_call.1
$region0: #{tpu_custom_call.1}
  #allocation0 [shape = 'u32[]', space=smem, size = 0x4, offset = 0x4, fixed_abs, tag = 'smem constant byte address 0x4 - core index']
  #allocation1 [shape = 'u32[144,128]{1,0:T(1,128)}', space=vmem, size = 0x12000, scoped, tag = 'internal scratch']
  %s0 = inlined_call_operand.vmem [shape: f32[64,16], index: 0, kind: input, shape index: {}]
  %s1 = inlined_call_operand.vmem [shape: f32[16,128], index: 1, kind: input, shape index: {}]
  %s2 = inlined_call_operand.vmem [shape: f32[1,128], index: 2, kind: input, shape index: {}]
  %s3 = inlined_call_operand.hbm [shape: f32[64,128], index: 3, kind: output, shape index: {}]
  %s4 = sld [smem:[#allocation0]]
  $region22: #{tpu_custom_call.1} parent=0
    _
  %s6 = ssub.s32 1, %s4
  %s7 = scalar_select 0, %s6, %s4
  $region1: #{tpu_custom_call.1} parent=0
    #allocation2 [shape = 'u8[32768]{0}', space=vmem, size = 0x8000, scoped, tag = 'output window, operand 0, single buffered']
    #allocation3 [shape = 's32[1]{0}', space=sflag, size = 0x4, scoped, tag = 'scoped memory for tpu_custom_call.1']
    %8 = vsyncpa [#allocation3], 0
    // Predicated region
    $region2: #{tpu_custom_call.1} parent=1 // pred_check
      _
    $region3: #{tpu_custom_call.1} parent=1 // pred_check_branch
      %10 = sbr.rel (0) target = $region5
    $region4: #{tpu_custom_call.1} parent=1 // pred_region
      _
    $region5: #{tpu_custom_call.1} parent=1 // pred_fallthru
      _
    // Predicated region
    $region6: #{tpu_custom_call.1} parent=1 // pred_check
      _
    $region7: #{tpu_custom_call.1} parent=1 // pred_check_branch
      %12 = sbr.rel (0) target = $region9
    $region8: #{tpu_custom_call.1} parent=1 // pred_region
      _
    $region9: #{tpu_custom_call.1} parent=1 // pred_fallthru
      _
    // Predicated region
    $region10: #{tpu_custom_call.1} parent=1 // pred_check
      _
    $region11: #{tpu_custom_call.1} parent=1 // pred_check_branch
      %14 = sbr.rel (0) target = $region13
    $region12: #{tpu_custom_call.1} parent=1 // pred_region
      _
    $region13: #{tpu_custom_call.1} parent=1 // pred_fallthru
      _
    %v15 = vld [vmem:[%s0] sm:$0xff]
    %v16 = vld [vmem:[%s0 + $0x8] sm:$0xff]
    %v17 = vld [vmem:[%s0 + $0x10] sm:$0xff]
    %v18 = vld [vmem:[%s0 + $0x18] sm:$0xff]
    %v19 = vld [vmem:[%s0 + $0x20] sm:$0xff]
    %v20 = vld [vmem:[%s0 + $0x28] sm:$0xff]
    %v21 = vld [vmem:[%s0 + $0x30] sm:$0xff]
    %v22 = vld [vmem:[%s0 + $0x38] sm:$0xff]
    %v23 = vld [vmem:[%s1] sm:$0xff]
    %v24 = vld [vmem:[%s1 + $0x8] sm:$0xff]
    %v25 = vld [vmem:[%s2] sm:$0x1]
    %v27 = vlaneseq
    %v28 = vshrl.u32 %v27, 7
    %v29 = vsub.s32 0, %v28
    %v30 = vrot.slane %v25, %v29
    %vm32 = vcmask 130048
    %v34 = vsel %vm32, %v15, 0
    %v37 = vsel %vm32, %v16, 0
    %v40 = vsel %vm32, %v17, 0
    %v43 = vsel %vm32, %v18, 0
    %v46 = vsel %vm32, %v19, 0
    %v49 = vsel %vm32, %v20, 0
    %v52 = vsel %vm32, %v21, 0
    %v55 = vsel %vm32, %v22, 0
    %57 = vmatprep.subr.mxu0 0.0
    %58 = vmatpush1.msra.mxu0 0.0
    %59 = vmatprep.subr.mxu0 0.0
    %60 = vmatpush1.msra.mxu0 0.0
    %61 = vmatprep.subr.mxu0 0.0
    %62 = vmatpush1.msra.mxu0 0.0
    %63 = vmatprep.subr.mxu0 0.0
    %64 = vmatpush1.msra.mxu0 0.0
    %65 = vmatprep.subr.mxu0 0.0
    %66 = vmatpush1.msra.mxu0 0.0
    %67 = vmatprep.subr.mxu0 0.0
    %68 = vmatpush1.msra.mxu0 0.0
    %69 = vmatprep.subr.mxu0 0.0
    %70 = vmatpush1.msra.mxu0 0.0
    %71 = vmatprep.subr.mxu0 0.0
    %72 = vmatpush1.msra.mxu0 0.0
    %73 = vmatprep.subr.mxu0 0.0
    %74 = vmatpush1.msra.mxu0 0.0
    %75 = vmatprep.subr.mxu0 0.0
    %76 = vmatpush1.msra.mxu0 0.0
    %77 = vmatprep.subr.mxu0 0.0
    %78 = vmatpush1.msra.mxu0 0.0
    %79 = vmatprep.subr.mxu0 0.0
    %80 = vmatpush1.msra.mxu0 0.0
    %81 = vmatprep.subr.mxu0 0.0
    %82 = vmatpush1.msra.mxu0 0.0
    %83 = vmatprep.subr.mxu0 0.0
    %84 = vmatpush1.msra.mxu0 0.0
    %85 = vmatprep.subr.mxu0 0.0
    %86 = vmatpush1.msra.mxu0 %v24
    %87 = vmatprep.subr.mxu0 0.0
    %88 = vmatpush1.msra.mxu0 %v23
    %89 = vmatprep.subr.mxu0 0.0
    %90 = vmatpush2.msra.mxu0 0.0
    %91 = vmatprep.subr.mxu0 0.0
    %92 = vmatpush2.msra.mxu0 0.0
    %93 = vmatprep.subr.mxu0 0.0
    %94 = vmatpush2.msra.mxu0 0.0
    %95 = vmatprep.subr.mxu0 0.0
    %96 = vmatpush2.msra.mxu0 0.0
    %97 = vmatprep.subr.mxu0 0.0
    %98 = vmatpush2.msra.mxu0 0.0
    %99 = vmatprep.subr.mxu0 0.0
    %100 = vmatpush2.msra.mxu0 0.0
    %101 = vmatprep.subr.mxu0 0.0
    %102 = vmatpush2.msra.mxu0 0.0
    %103 = vmatprep.subr.mxu0 0.0
    %104 = vmatpush2.msra.mxu0 0.0
    %105 = vmatprep.subr.mxu0 0.0
    %106 = vmatpush2.msra.mxu0 0.0
    %107 = vmatprep.subr.mxu0 0.0
    %108 = vmatpush2.msra.mxu0 0.0
    %109 = vmatprep.subr.mxu0 0.0
    %110 = vmatpush2.msra.mxu0 0.0
    %111 = vmatprep.subr.mxu0 0.0
    %112 = vmatpush2.msra.mxu0 0.0
    %113 = vmatprep.subr.mxu0 0.0
    %114 = vmatpush2.msra.mxu0 0.0
    %115 = vmatprep.subr.mxu0 0.0
    %116 = vmatpush2.msra.mxu0 0.0
    %117 = vmatprep.subr.mxu0 0.0
    %118 = vmatpush2.msra.mxu0 0.0
    %119 = vmatprep.subr.mxu0 0.0
    %120 = vmatpush2.msra.mxu0 0.0
    %121 = vmatprep.mubr.f32.mxu0 0.0
    %122 = vmatmul.mubr.f32.gmra.mxu0 %v34
    %v123 = vpop.f32.mrf.mxu0
    %v124 = vadd.f32 %v30, %v123
    %v125 = vpop.f32.mrf.mxu0
    %126 = vmatprep.mubr.f32.mxu0 0.0
    %127 = vmatmul.mubr.f32.gmra.mxu0 %v37
    %v128 = vpop.f32.mrf.mxu0
    %v129 = vadd.f32 %v30, %v128
    %v130 = vpop.f32.mrf.mxu0
    %131 = vmatprep.mubr.f32.mxu0 0.0
    %132 = vmatmul.mubr.f32.gmra.mxu0 %v40
    %v133 = vpop.f32.mrf.mxu0
    %v134 = vadd.f32 %v30, %v133
    %v135 = vpop.f32.mrf.mxu0
    %136 = vmatprep.mubr.f32.mxu0 0.0
    %137 = vmatmul.mubr.f32.gmra.mxu0 %v43
    %v138 = vpop.f32.mrf.mxu0
    %v139 = vadd.f32 %v30, %v138
    %v140 = vpop.f32.mrf.mxu0
    %141 = vmatprep.mubr.f32.mxu0 0.0
    %142 = vmatmul.mubr.f32.gmra.mxu0 %v46
    %v143 = vpop.f32.mrf.mxu0
    %v144 = vadd.f32 %v30, %v143
    %v145 = vpop.f32.mrf.mxu0
    %146 = vmatprep.mubr.f32.mxu0 0.0
    %147 = vmatmul.mubr.f32.gmra.mxu0 %v49
    %v148 = vpop.f32.mrf.mxu0
    %v149 = vadd.f32 %v30, %v148
    %v150 = vpop.f32.mrf.mxu0
    %151 = vmatprep.mubr.f32.mxu0 0.0
    %152 = vmatmul.mubr.f32.gmra.mxu0 %v52
    %v153 = vpop.f32.mrf.mxu0
    %v154 = vadd.f32 %v30, %v153
    %v155 = vpop.f32.mrf.mxu0
    %156 = vmatprep.mubr.f32.mxu0 0.0
    %157 = vmatmul.mubr.f32.gmra.mxu0 %v55
    %v158 = vpop.f32.mrf.mxu0
    %v159 = vadd.f32 %v30, %v158
    %v160 = vpop.f32.mrf.mxu0
    %161 = vdwg.mxu0
    %162 = vst [vmem:[#allocation2] sm:$0xff] %v124
    %163 = vst [vmem:[#allocation2 + $0x8] sm:$0xff] %v129
    %164 = vst [vmem:[#allocation2 + $0x10] sm:$0xff] %v134
    %165 = vst [vmem:[#allocation2 + $0x18] sm:$0xff] %v139
    %166 = vst [vmem:[#allocation2 + $0x20] sm:$0xff] %v144
    %167 = vst [vmem:[#allocation2 + $0x28] sm:$0xff] %v149
    %168 = vst [vmem:[#allocation2 + $0x30] sm:$0xff] %v154
    %169 = vst [vmem:[#allocation2 + $0x38] sm:$0xff] %v159
    // Predicated region
    $region14: #{tpu_custom_call.1} parent=1 // pred_check
      _
    $region15: #{tpu_custom_call.1} parent=1 // pred_check_branch
      %171 = sbr.rel (0) target = $region17
    $region16: #{tpu_custom_call.1} parent=1 // pred_region
      %s173 = ssub.s32 1024, 1024
      %174 = vsyncadd [#allocation3], %s173
      %s175 = sshll.u32 [#allocation2], 4
      %s176 = int_to_ptr.vmem [resolvable:$true] %s175
      %181 = dma.vmem_to_hbm [thread:$0]  %s176, 1024, %s3, [#allocation3], 128, 128, 8
    $region17: #{tpu_custom_call.1} parent=1 // pred_fallthru
      _
    // Predicated region
    $region18: #{tpu_custom_call.1} parent=1 // pred_check
      _
    $region19: #{tpu_custom_call.1} parent=1 // pred_check_branch
      %183 = sbr.rel (0) target = $region21
    $region20: #{tpu_custom_call.1} parent=1 // pred_region
      %184 = dma.done [#allocation3], 1024
    $region21: #{tpu_custom_call.1} parent=1 // pred_fallthru
      _
    %185 = vsyncpa [#allocation3], 1

</llo_original>
